<compile_context>
chip_gen: v6e
topology: v6e:2x2x1
jax: 0.10.0
libtpu: 0.0.40
codegen_flags: <defaults>
</compile_context>

<pallas_src>
import jax
import jax.numpy as jnp
from jax.experimental import pallas as pl
from jax.experimental.pallas import tpu as pltpu


def conv_norm_pool(x_ncl, params):
    """x_ncl: (N, C_in, L) float32, PyTorch NCL layout. Returns (N, H, L // 2)."""
    w1, b1, g1, be1, w2, b2, g2, be2 = params
    del b1, b2                    # BatchNorm's mean subtraction cancels the conv biases.
    N, Cin, L = x_ncl.shape
    K, _, H = w1.shape
    assert L % 2 == 0, "MaxPool1d(2) parity split assumes an even length"
    assert H % 8 == 0, "hidden channels should fill whole sublane tiles"
    L1 = L - K + 1                # valid conv positions per sample (= BN batch per sample)
    Lp = L // 2
    NLp = N * Lp
    Cp = -(-Cin // 8) * 8         # pad input channels up to a full sublane tile
    eps = 1e-5
    inv_cnt = 1.0 / float(N * L1)

    # ---- host-side (constant-foldable) layout prep --------------------------
    # Parity split: x_eo[q, c, n*Lp + j] == x[n, c, 2*j + q].
    x_cnl = jnp.transpose(x_ncl, (1, 0, 2)).astype(jnp.float32)           # (Cin, N, L)
    x_eo = jnp.transpose(x_cnl.reshape(Cin, N, Lp, 2), (3, 0, 1, 2)).reshape(2, Cin, NLp)
    if Cp != Cin:
        x_eo = jnp.pad(x_eo, ((0, 0), (0, Cp - Cin), (0, 0)))

    # im2col weights: row-block d of the stacked lhs holds tap index K-1-d, so
    # w_flat[h, d*C + c] == w[K-1-d, c, h]; zero-padded channels get zero weight.
    w1p = jnp.pad(w1, ((0, 0), (0, Cp - Cin), (0, 0)))                     # (K, Cp, H)
    w1f = jnp.transpose(w1p[::-1], (2, 0, 1)).reshape(H, K * Cp).astype(jnp.bfloat16)
    w2f = jnp.transpose(w2[::-1], (2, 0, 1)).reshape(H, K * H).astype(jnp.bfloat16)

    # 0/1 validity masks per parity: lane n*Lp + j is a pad position (the
    # F.pad(K-1, 0) zeros, excluded from the BN batch stats) iff 2*j + q < K-1.
    j_in = jnp.tile(jnp.arange(Lp, dtype=jnp.int32), (N,))                 # (NLp,)
    masks = jnp.stack([2 * j_in >= K - 1, 2 * j_in + 1 >= K - 1])
    masks = masks.astype(jnp.float32).reshape(2, 1, NLp)

    g1c, be1c = g1.reshape(H, 1), be1.reshape(H, 1)
    g2c, be2c = g2.reshape(H, 1), be2.reshape(H, 1)

    # ---- kernel --------------------------------------------------------------
    def kernel(x_ref, m_ref, w1_ref, w2_ref, g1_ref, be1_ref, g2_ref, be2_ref, o_ref):
        mask_e = m_ref[0]                                      # (1, NLp) f32
        mask_o = m_ref[1]

        def conv_pair(h_e, h_o, w_ref):
            # h_e/h_o: (C, NLp) f32 with value [c, n*Lp+j] = input[c, l=2j+parity].
            # Conv output at position l uses inputs l-d, d=0..K-1; in parity space
            # that is source parity (q-d)%2 rolled right by (d + q' - q)//2 lanes.
            # Roll wraparound only lands in pad positions, masked downstream.
            rolled = {}                                        # (parity, shift) -> (C, NLp)

            def get(qp, s):
                if (qp, s) not in rolled:
                    src = h_e if qp == 0 else h_o
                    rolled[(qp, s)] = src if s == 0 else pltpu.roll(src, s, axis=1)
                return rolled[(qp, s)]

            outs = []
            for q in (0, 1):
                blocks = []
                for d in range(K):
                    qp = (q - d) % 2
                    s = (d + qp - q) // 2
                    blocks.append(get(qp, s))
                stack = jnp.concatenate(blocks, axis=0).astype(jnp.bfloat16)   # (K*C, NLp)
                outs.append(jnp.dot(w_ref[...], stack,
                                    preferred_element_type=jnp.float32))       # (H, NLp)
            return outs[0], outs[1]

        def bn_tanh_mask(c_e, c_o, g_ref, be_ref):
            # Training-mode BatchNorm (biased batch variance over the N*L1 valid
            # positions), fused to one scale/shift, then tanh; pad positions are
            # forced back to the F.pad zeros.
            cm_e = c_e * mask_e
            cm_o = c_o * mask_o
            s = (jnp.sum(cm_e, axis=1, keepdims=True)
                 + jnp.sum(cm_o, axis=1, keepdims=True))                   # (H, 1)
            sq = (jnp.sum(cm_e * c_e, axis=1, keepdims=True)
                  + jnp.sum(cm_o * c_o, axis=1, keepdims=True))            # (H, 1)
            mean = s * inv_cnt
            var = sq * inv_cnt - mean * mean
            scale = g_ref[...] * jax.lax.rsqrt(var + eps)
            shift = be_ref[...] - mean * scale
            p_e = jnp.tanh(c_e * scale + shift) * mask_e
            p_o = jnp.tanh(c_o * scale + shift) * mask_o
            return p_e, p_o

        c1e, c1o = conv_pair(x_ref[0], x_ref[1], w1_ref)
        p1e, p1o = bn_tanh_mask(c1e, c1o, g1_ref, be1_ref)
        c2e, c2o = conv_pair(p1e, p1o, w2_ref)
        p2e, p2o = bn_tanh_mask(c2e, c2o, g2_ref, be2_ref)

        # MaxPool1d(2): pairs are exactly (even[j], odd[j]); pad zeros included.
        pooled = jnp.maximum(p2e, p2o)                         # (H, N*Lp)
        for n in range(N):                                     # final (N, H, Lp) layout
            o_ref[n] = pooled[:, n * Lp:(n + 1) * Lp]

    vmem = pl.BlockSpec(memory_space=pltpu.MemorySpace.VMEM)
    return pl.pallas_call(
        kernel,
        out_shape=jax.ShapeDtypeStruct((N, H, Lp), jnp.float32),
        in_specs=[vmem] * 8,
        out_specs=vmem,
    )(x_eo, masks, w1f, w2f, g1c, be1c, g2c, be2c)


def _reference(x_ncl, params, mxu_dtype=jnp.bfloat16):
    """Plain-JAX replica of the PyTorch forward (biases included).  The conv
    matmul operands are rounded to `mxu_dtype` (f32 accumulation) to mirror the
    kernel's intentional bf16 MXU inputs; everything else is exact f32."""
    w1, b1, g1, be1, w2, b2, g2, be2 = params
    K = w1.shape[0]
    eps = 1e-5
    x = jnp.transpose(x_ncl, (0, 2, 1)).astype(jnp.float32)    # (N, L, C)

    def conv(h, w, b):
        L1 = h.shape[1] - K + 1
        hq, wq = h.astype(mxu_dtype), w.astype(mxu_dtype)
        out = sum(jnp.einsum('nlc,ch->nlh', hq[:, t:t + L1, :], wq[t],
                             preferred_element_type=jnp.float32) for t in range(K))
        return out + b[None, None, :]

    def bn(h, g, be):
        m = h.mean(axis=(0, 1), keepdims=True)
        v = ((h - m) ** 2).mean(axis=(0, 1), keepdims=True)
        return (h - m) * jax.lax.rsqrt(v + eps) * g + be

    h = jnp.tanh(bn(conv(x, w1, b1), g1, be1))
    h = jnp.pad(h, ((0, 0), (K - 1, 0), (0, 0)))
    h = jnp.tanh(bn(conv(h, w2, b2), g2, be2))
    h = jnp.pad(h, ((0, 0), (K - 1, 0), (0, 0)))
    Lp = h.shape[1] // 2
    h = h[:, :2 * Lp].reshape(h.shape[0], Lp, 2, h.shape[2]).max(axis=2)
    return jnp.transpose(h, (0, 2, 1))


if __name__ == "__main__":
    # Module hyperparameters: input_size=4, hidden_size=8, kernel_size=3; L=16, batch=2.
    N, Cin, L = 2, 4, 16
    H, K = 8, 3

    key = jax.random.PRNGKey(0)
    ks = jax.random.split(key, 9)
    # Conv weights stored as (K, C_in, C_out); this corresponds to PyTorch's
    # (C_out, C_in, K) via w_here[t, c, h] == w_torch[h, c, t].
    w1 = 0.3 * jax.random.normal(ks[0], (K, Cin, H), jnp.float32)
    b1 = 0.1 * jax.random.normal(ks[1], (H,), jnp.float32)
    g1 = 1.0 + 0.1 * jax.random.normal(ks[2], (H,), jnp.float32)
    be1 = 0.1 * jax.random.normal(ks[3], (H,), jnp.float32)
    w2 = 0.3 * jax.random.normal(ks[4], (K, H, H), jnp.float32)
    b2 = 0.1 * jax.random.normal(ks[5], (H,), jnp.float32)
    g2 = 1.0 + 0.1 * jax.random.normal(ks[6], (H,), jnp.float32)
    be2 = 0.1 * jax.random.normal(ks[7], (H,), jnp.float32)
    params = (w1, b1, g1, be1, w2, b2, g2, be2)

    x = jax.random.normal(ks[8], (N, Cin, L), jnp.float32)     # PyTorch NCL input

    out = jax.block_until_ready(conv_norm_pool(x, params))
    ref = jax.block_until_ready(_reference(x, params))

    assert out.shape == (N, H, L // 2), out.shape
    max_err = float(jnp.max(jnp.abs(out - ref)))
    assert jnp.allclose(out, ref, atol=5e-3, rtol=5e-3), max_err
    print("KERNEL_OK")
</pallas_src>

<mosaic_0001>
module attributes {stable_mosaic.version = 11 : i64} {
  func.func @kernel(%arg0: memref<2x8x16xf32, #tpu.memory_space<vmem>>, %arg1: memref<2x1x16xf32, #tpu.memory_space<vmem>>, %arg2: memref<8x24xbf16, #tpu.memory_space<vmem>>, %arg3: memref<8x24xbf16, #tpu.memory_space<vmem>>, %arg4: memref<8x1xf32, #tpu.memory_space<vmem>>, %arg5: memref<8x1xf32, #tpu.memory_space<vmem>>, %arg6: memref<8x1xf32, #tpu.memory_space<vmem>>, %arg7: memref<8x1xf32, #tpu.memory_space<vmem>>, %arg8: memref<2x8x8xf32, #tpu.memory_space<vmem>>) attributes {dimension_semantics = [], scalar_prefetch = 0 : i64, scratch_operands = 0 : i64, tpu.core_type = #tpu.core_type<tc>} {
    %c0 = arith.constant 0 : index
    %c0_0 = arith.constant 0 : index
    %c0_1 = arith.constant 0 : index
    %0 = vector.load %arg1[%c0, %c0_0, %c0_1] : memref<2x1x16xf32, #tpu.memory_space<vmem>>, vector<1x1x16xf32>
    %1 = vector.shape_cast %0 : vector<1x1x16xf32> to vector<1x16xf32>
    %c1 = arith.constant 1 : index
    %c0_2 = arith.constant 0 : index
    %c0_3 = arith.constant 0 : index
    %2 = vector.load %arg1[%c1, %c0_2, %c0_3] : memref<2x1x16xf32, #tpu.memory_space<vmem>>, vector<1x1x16xf32>
    %3 = vector.shape_cast %2 : vector<1x1x16xf32> to vector<1x16xf32>
    %c0_4 = arith.constant 0 : index
    %c0_5 = arith.constant 0 : index
    %c0_6 = arith.constant 0 : index
    %4 = vector.load %arg0[%c0_4, %c0_5, %c0_6] : memref<2x8x16xf32, #tpu.memory_space<vmem>>, vector<1x8x16xf32>
    %5 = vector.shape_cast %4 : vector<1x8x16xf32> to vector<8x16xf32>
    %c1_7 = arith.constant 1 : index
    %c0_8 = arith.constant 0 : index
    %c0_9 = arith.constant 0 : index
    %6 = vector.load %arg0[%c1_7, %c0_8, %c0_9] : memref<2x8x16xf32, #tpu.memory_space<vmem>>, vector<1x8x16xf32>
    %7 = vector.shape_cast %6 : vector<1x8x16xf32> to vector<8x16xf32>
    %c1_i32 = arith.constant 1 : i32
    %8 = tpu.dynamic_rotate %7 by %c1_i32 dim 1 : vector<8x16xf32>, i32 -> vector<8x16xf32>
    %c1_i32_10 = arith.constant 1 : i32
    %9 = tpu.dynamic_rotate %5 by %c1_i32_10 dim 1 : vector<8x16xf32>, i32 -> vector<8x16xf32>
    %10 = tpu.concatenate %5, %8, %9 in 0 : vector<8x16xf32>, vector<8x16xf32>, vector<8x16xf32> -> vector<24x16xf32>
    %11 = arith.truncf %10 : vector<24x16xf32> to vector<24x16xbf16>
    %c0_11 = arith.constant 0 : index
    %c0_12 = arith.constant 0 : index
    %12 = vector.load %arg2[%c0_11, %c0_12] : memref<8x24xbf16, #tpu.memory_space<vmem>>, vector<8x24xbf16>
    %cst = arith.constant dense<0.000000e+00> : vector<8x16xf32>
    %13 = tpu.matmul %12, %11, %cst {dimension_numbers = #tpu.dot_dimension_numbers<[1], [0], [0], [1], [0, 0, 1, 1], [], []>} : vector<8x24xbf16>, vector<24x16xbf16>, vector<8x16xf32> -> vector<8x16xf32>
    %14 = tpu.concatenate %7, %5, %8 in 0 : vector<8x16xf32>, vector<8x16xf32>, vector<8x16xf32> -> vector<24x16xf32>
    %15 = arith.truncf %14 : vector<24x16xf32> to vector<24x16xbf16>
    %c0_13 = arith.constant 0 : index
    %c0_14 = arith.constant 0 : index
    %16 = vector.load %arg2[%c0_13, %c0_14] : memref<8x24xbf16, #tpu.memory_space<vmem>>, vector<8x24xbf16>
    %cst_15 = arith.constant dense<0.000000e+00> : vector<8x16xf32>
    %17 = tpu.matmul %16, %15, %cst_15 {dimension_numbers = #tpu.dot_dimension_numbers<[1], [0], [0], [1], [0, 0, 1, 1], [], []>} : vector<8x24xbf16>, vector<24x16xbf16>, vector<8x16xf32> -> vector<8x16xf32>
    %18 = vector.broadcast %1 : vector<1x16xf32> to vector<8x16xf32>
    %19 = arith.mulf %13, %18 : vector<8x16xf32>
    %20 = vector.broadcast %3 : vector<1x16xf32> to vector<8x16xf32>
    %21 = arith.mulf %17, %20 : vector<8x16xf32>
    %cst_16 = arith.constant dense<0.000000e+00> : vector<8xf32>
    %22 = vector.multi_reduction <add>, %19, %cst_16 [1] : vector<8x16xf32> to vector<8xf32>
    %23 = vector.shape_cast %22 : vector<8xf32> to vector<8x1xf32>
    %cst_17 = arith.constant dense<0.000000e+00> : vector<8xf32>
    %24 = vector.multi_reduction <add>, %21, %cst_17 [1] : vector<8x16xf32> to vector<8xf32>
    %25 = vector.shape_cast %24 : vector<8xf32> to vector<8x1xf32>
    %26 = arith.addf %23, %25 : vector<8x1xf32>
    %27 = arith.mulf %19, %13 : vector<8x16xf32>
    %cst_18 = arith.constant dense<0.000000e+00> : vector<8xf32>
    %28 = vector.multi_reduction <add>, %27, %cst_18 [1] : vector<8x16xf32> to vector<8xf32>
    %29 = vector.shape_cast %28 : vector<8xf32> to vector<8x1xf32>
    %30 = arith.mulf %21, %17 : vector<8x16xf32>
    %cst_19 = arith.constant dense<0.000000e+00> : vector<8xf32>
    %31 = vector.multi_reduction <add>, %30, %cst_19 [1] : vector<8x16xf32> to vector<8xf32>
    %32 = vector.shape_cast %31 : vector<8xf32> to vector<8x1xf32>
    %33 = arith.addf %29, %32 : vector<8x1xf32>
    %cst_20 = arith.constant 0.0357142873 : f32
    %34 = vector.broadcast %cst_20 : f32 to vector<8x1xf32>
    %35 = arith.mulf %26, %34 : vector<8x1xf32>
    %cst_21 = arith.constant 0.0357142873 : f32
    %36 = vector.broadcast %cst_21 : f32 to vector<8x1xf32>
    %37 = arith.mulf %33, %36 : vector<8x1xf32>
    %38 = arith.mulf %35, %35 : vector<8x1xf32>
    %39 = arith.subf %37, %38 : vector<8x1xf32>
    %c0_22 = arith.constant 0 : index
    %c0_23 = arith.constant 0 : index
    %40 = vector.load %arg4[%c0_22, %c0_23] : memref<8x1xf32, #tpu.memory_space<vmem>>, vector<8x1xf32>
    %cst_24 = arith.constant 9.99999974E-6 : f32
    %41 = vector.broadcast %cst_24 : f32 to vector<8x1xf32>
    %42 = arith.addf %39, %41 : vector<8x1xf32>
    %43 = math.rsqrt %42 : vector<8x1xf32>
    %44 = arith.mulf %40, %43 : vector<8x1xf32>
    %c0_25 = arith.constant 0 : index
    %c0_26 = arith.constant 0 : index
    %45 = vector.load %arg5[%c0_25, %c0_26] : memref<8x1xf32, #tpu.memory_space<vmem>>, vector<8x1xf32>
    %46 = arith.mulf %35, %44 : vector<8x1xf32>
    %47 = arith.subf %45, %46 : vector<8x1xf32>
    %48 = vector.broadcast %44 : vector<8x1xf32> to vector<8x16xf32>
    %49 = arith.mulf %13, %48 : vector<8x16xf32>
    %50 = vector.broadcast %47 : vector<8x1xf32> to vector<8x16xf32>
    %51 = arith.addf %49, %50 : vector<8x16xf32>
    %52 = math.tanh %51 : vector<8x16xf32>
    %53 = vector.broadcast %1 : vector<1x16xf32> to vector<8x16xf32>
    %54 = arith.mulf %52, %53 : vector<8x16xf32>
    %55 = vector.broadcast %44 : vector<8x1xf32> to vector<8x16xf32>
    %56 = arith.mulf %17, %55 : vector<8x16xf32>
    %57 = vector.broadcast %47 : vector<8x1xf32> to vector<8x16xf32>
    %58 = arith.addf %56, %57 : vector<8x16xf32>
    %59 = math.tanh %58 : vector<8x16xf32>
    %60 = vector.broadcast %3 : vector<1x16xf32> to vector<8x16xf32>
    %61 = arith.mulf %59, %60 : vector<8x16xf32>
    %c1_i32_27 = arith.constant 1 : i32
    %62 = tpu.dynamic_rotate %61 by %c1_i32_27 dim 1 : vector<8x16xf32>, i32 -> vector<8x16xf32>
    %c1_i32_28 = arith.constant 1 : i32
    %63 = tpu.dynamic_rotate %54 by %c1_i32_28 dim 1 : vector<8x16xf32>, i32 -> vector<8x16xf32>
    %64 = tpu.concatenate %54, %62, %63 in 0 : vector<8x16xf32>, vector<8x16xf32>, vector<8x16xf32> -> vector<24x16xf32>
    %65 = arith.truncf %64 : vector<24x16xf32> to vector<24x16xbf16>
    %c0_29 = arith.constant 0 : index
    %c0_30 = arith.constant 0 : index
    %66 = vector.load %arg3[%c0_29, %c0_30] : memref<8x24xbf16, #tpu.memory_space<vmem>>, vector<8x24xbf16>
    %cst_31 = arith.constant dense<0.000000e+00> : vector<8x16xf32>
    %67 = tpu.matmul %66, %65, %cst_31 {dimension_numbers = #tpu.dot_dimension_numbers<[1], [0], [0], [1], [0, 0, 1, 1], [], []>} : vector<8x24xbf16>, vector<24x16xbf16>, vector<8x16xf32> -> vector<8x16xf32>
    %68 = tpu.concatenate %61, %54, %62 in 0 : vector<8x16xf32>, vector<8x16xf32>, vector<8x16xf32> -> vector<24x16xf32>
    %69 = arith.truncf %68 : vector<24x16xf32> to vector<24x16xbf16>
    %c0_32 = arith.constant 0 : index
    %c0_33 = arith.constant 0 : index
    %70 = vector.load %arg3[%c0_32, %c0_33] : memref<8x24xbf16, #tpu.memory_space<vmem>>, vector<8x24xbf16>
    %cst_34 = arith.constant dense<0.000000e+00> : vector<8x16xf32>
    %71 = tpu.matmul %70, %69, %cst_34 {dimension_numbers = #tpu.dot_dimension_numbers<[1], [0], [0], [1], [0, 0, 1, 1], [], []>} : vector<8x24xbf16>, vector<24x16xbf16>, vector<8x16xf32> -> vector<8x16xf32>
    %72 = vector.broadcast %1 : vector<1x16xf32> to vector<8x16xf32>
    %73 = arith.mulf %67, %72 : vector<8x16xf32>
    %74 = vector.broadcast %3 : vector<1x16xf32> to vector<8x16xf32>
    %75 = arith.mulf %71, %74 : vector<8x16xf32>
    %cst_35 = arith.constant dense<0.000000e+00> : vector<8xf32>
    %76 = vector.multi_reduction <add>, %73, %cst_35 [1] : vector<8x16xf32> to vector<8xf32>
    %77 = vector.shape_cast %76 : vector<8xf32> to vector<8x1xf32>
    %cst_36 = arith.constant dense<0.000000e+00> : vector<8xf32>
    %78 = vector.multi_reduction <add>, %75, %cst_36 [1] : vector<8x16xf32> to vector<8xf32>
    %79 = vector.shape_cast %78 : vector<8xf32> to vector<8x1xf32>
    %80 = arith.addf %77, %79 : vector<8x1xf32>
    %81 = arith.mulf %73, %67 : vector<8x16xf32>
    %cst_37 = arith.constant dense<0.000000e+00> : vector<8xf32>
    %82 = vector.multi_reduction <add>, %81, %cst_37 [1] : vector<8x16xf32> to vector<8xf32>
    %83 = vector.shape_cast %82 : vector<8xf32> to vector<8x1xf32>
    %84 = arith.mulf %75, %71 : vector<8x16xf32>
    %cst_38 = arith.constant dense<0.000000e+00> : vector<8xf32>
    %85 = vector.multi_reduction <add>, %84, %cst_38 [1] : vector<8x16xf32> to vector<8xf32>
    %86 = vector.shape_cast %85 : vector<8xf32> to vector<8x1xf32>
    %87 = arith.addf %83, %86 : vector<8x1xf32>
    %cst_39 = arith.constant 0.0357142873 : f32
    %88 = vector.broadcast %cst_39 : f32 to vector<8x1xf32>
    %89 = arith.mulf %80, %88 : vector<8x1xf32>
    %cst_40 = arith.constant 0.0357142873 : f32
    %90 = vector.broadcast %cst_40 : f32 to vector<8x1xf32>
    %91 = arith.mulf %87, %90 : vector<8x1xf32>
    %92 = arith.mulf %89, %89 : vector<8x1xf32>
    %93 = arith.subf %91, %92 : vector<8x1xf32>
    %c0_41 = arith.constant 0 : index
    %c0_42 = arith.constant 0 : index
    %94 = vector.load %arg6[%c0_41, %c0_42] : memref<8x1xf32, #tpu.memory_space<vmem>>, vector<8x1xf32>
    %cst_43 = arith.constant 9.99999974E-6 : f32
    %95 = vector.broadcast %cst_43 : f32 to vector<8x1xf32>
    %96 = arith.addf %93, %95 : vector<8x1xf32>
    %97 = math.rsqrt %96 : vector<8x1xf32>
    %98 = arith.mulf %94, %97 : vector<8x1xf32>
    %c0_44 = arith.constant 0 : index
    %c0_45 = arith.constant 0 : index
    %99 = vector.load %arg7[%c0_44, %c0_45] : memref<8x1xf32, #tpu.memory_space<vmem>>, vector<8x1xf32>
    %100 = arith.mulf %89, %98 : vector<8x1xf32>
    %101 = arith.subf %99, %100 : vector<8x1xf32>
    %102 = vector.broadcast %98 : vector<8x1xf32> to vector<8x16xf32>
    %103 = arith.mulf %67, %102 : vector<8x16xf32>
    %104 = vector.broadcast %101 : vector<8x1xf32> to vector<8x16xf32>
    %105 = arith.addf %103, %104 : vector<8x16xf32>
    %106 = math.tanh %105 : vector<8x16xf32>
    %107 = vector.broadcast %1 : vector<1x16xf32> to vector<8x16xf32>
    %108 = arith.mulf %106, %107 : vector<8x16xf32>
    %109 = vector.broadcast %98 : vector<8x1xf32> to vector<8x16xf32>
    %110 = arith.mulf %71, %109 : vector<8x16xf32>
    %111 = vector.broadcast %101 : vector<8x1xf32> to vector<8x16xf32>
    %112 = arith.addf %110, %111 : vector<8x16xf32>
    %113 = math.tanh %112 : vector<8x16xf32>
    %114 = vector.broadcast %3 : vector<1x16xf32> to vector<8x16xf32>
    %115 = arith.mulf %113, %114 : vector<8x16xf32>
    %116 = arith.maximumf %108, %115 : vector<8x16xf32>
    %117 = vector.extract_strided_slice %116 {offsets = [0, 0], sizes = [8, 8], strides = [1, 1]} : vector<8x16xf32> to vector<8x8xf32>
    %c0_46 = arith.constant 0 : index
    %c0_47 = arith.constant 0 : index
    %c0_48 = arith.constant 0 : index
    %118 = vector.load %arg8[%c0_46, %c0_47, %c0_48] : memref<2x8x8xf32, #tpu.memory_space<vmem>>, vector<1x8x8xf32>
    %119 = vector.shape_cast %118 : vector<1x8x8xf32> to vector<8x8xf32>
    %120 = vector.shape_cast %117 : vector<8x8xf32> to vector<1x8x8xf32>
    tpu.vector_store %arg8[%c0_46, %c0_47, %c0_48], %120 {strides = array<i32>} : memref<2x8x8xf32, #tpu.memory_space<vmem>>, vector<1x8x8xf32>,
    %121 = vector.extract_strided_slice %116 {offsets = [0, 8], sizes = [8, 8], strides = [1, 1]} : vector<8x16xf32> to vector<8x8xf32>
    %c1_49 = arith.constant 1 : index
    %c0_50 = arith.constant 0 : index
    %c0_51 = arith.constant 0 : index
    %122 = vector.load %arg8[%c1_49, %c0_50, %c0_51] : memref<2x8x8xf32, #tpu.memory_space<vmem>>, vector<1x8x8xf32>
    %123 = vector.shape_cast %122 : vector<1x8x8xf32> to vector<8x8xf32>
    %124 = vector.shape_cast %121 : vector<8x8xf32> to vector<1x8x8xf32>
    tpu.vector_store %arg8[%c1_49, %c0_50, %c0_51], %124 {strides = array<i32>} : memref<2x8x8xf32, #tpu.memory_space<vmem>>, vector<1x8x8xf32>,
    return
  }
}

</mosaic_0001>

<llo_original>
// kernel: tpu_custom_call.1
$region0: #{tpu_custom_call.1}
  #allocation0 [shape = 'u32[]', space=smem, size = 0x4, offset = 0x4, fixed_abs, tag = 'smem constant byte address 0x4 - core index']
  #allocation1 [shape = 'u32[144,128]{1,0:T(1,128)}', space=vmem, size = 0x12000, scoped, tag = 'internal scratch']
  %s0 = inlined_call_operand.vmem [shape: f32[2,8,16], index: 0, kind: input, shape index: {}]
  %s1 = inlined_call_operand.vmem [shape: f32[2,1,16], index: 1, kind: input, shape index: {}]
  %s2 = inlined_call_operand.vmem [shape: bf16[8,24], index: 2, kind: input, shape index: {}]
  %s3 = inlined_call_operand.vmem [shape: bf16[8,24], index: 3, kind: input, shape index: {}]
  %s4 = inlined_call_operand.vmem [shape: f32[8,1], index: 4, kind: input, shape index: {}]
  %s5 = inlined_call_operand.vmem [shape: f32[8,1], index: 5, kind: input, shape index: {}]
  %s6 = inlined_call_operand.vmem [shape: f32[8,1], index: 6, kind: input, shape index: {}]
  %s7 = inlined_call_operand.vmem [shape: f32[8,1], index: 7, kind: input, shape index: {}]
  %s8 = inlined_call_operand.hbm [shape: f32[2,8,8], index: 8, kind: output, shape index: {}]
  %s9 = sld [smem:[#allocation0]]
  $region42: #{tpu_custom_call.1} parent=0
    _
  %s11 = ssub.s32 1, %s9
  %s12 = scalar_select 0, %s11, %s9
  $region1: #{tpu_custom_call.1} parent=0
    #allocation2 [shape = 'u8[8192]{0}', space=vmem, size = 0x2000, scoped, tag = 'output window, operand 0, single buffered']
    #allocation3 [shape = 's32[1]{0}', space=sflag, size = 0x4, scoped, tag = 'scoped memory for tpu_custom_call.1']
    %13 = vsyncpa [#allocation3], 0
    // Predicated region
    $region2: #{tpu_custom_call.1} parent=1 // pred_check
      _
    $region3: #{tpu_custom_call.1} parent=1 // pred_check_branch
      %15 = sbr.rel (0) target = $region5
    $region4: #{tpu_custom_call.1} parent=1 // pred_region
      _
    $region5: #{tpu_custom_call.1} parent=1 // pred_fallthru
      _
    // Predicated region
    $region6: #{tpu_custom_call.1} parent=1 // pred_check
      _
    $region7: #{tpu_custom_call.1} parent=1 // pred_check_branch
      %17 = sbr.rel (0) target = $region9
    $region8: #{tpu_custom_call.1} parent=1 // pred_region
      _
    $region9: #{tpu_custom_call.1} parent=1 // pred_fallthru
      _
    // Predicated region
    $region10: #{tpu_custom_call.1} parent=1 // pred_check
      _
    $region11: #{tpu_custom_call.1} parent=1 // pred_check_branch
      %19 = sbr.rel (0) target = $region13
    $region12: #{tpu_custom_call.1} parent=1 // pred_region
      _
    $region13: #{tpu_custom_call.1} parent=1 // pred_fallthru
      _
    // Predicated region
    $region14: #{tpu_custom_call.1} parent=1 // pred_check
      _
    $region15: #{tpu_custom_call.1} parent=1 // pred_check_branch
      %21 = sbr.rel (0) target = $region17
    $region16: #{tpu_custom_call.1} parent=1 // pred_region
      _
    $region17: #{tpu_custom_call.1} parent=1 // pred_fallthru
      _
    // Predicated region
    $region18: #{tpu_custom_call.1} parent=1 // pred_check
      _
    $region19: #{tpu_custom_call.1} parent=1 // pred_check_branch
      %23 = sbr.rel (0) target = $region21
    $region20: #{tpu_custom_call.1} parent=1 // pred_region
      _
    $region21: #{tpu_custom_call.1} parent=1 // pred_fallthru
      _
    // Predicated region
    $region22: #{tpu_custom_call.1} parent=1 // pred_check
      _
    $region23: #{tpu_custom_call.1} parent=1 // pred_check_branch
      %25 = sbr.rel (0) target = $region25
    $region24: #{tpu_custom_call.1} parent=1 // pred_region
      _
    $region25: #{tpu_custom_call.1} parent=1 // pred_fallthru
      _
    // Predicated region
    $region26: #{tpu_custom_call.1} parent=1 // pred_check
      _
    $region27: #{tpu_custom_call.1} parent=1 // pred_check_branch
      %27 = sbr.rel (0) target = $region29
    $region28: #{tpu_custom_call.1} parent=1 // pred_region
      _
    $region29: #{tpu_custom_call.1} parent=1 // pred_fallthru
      _
    // Predicated region
    $region30: #{tpu_custom_call.1} parent=1 // pred_check
      _
    $region31: #{tpu_custom_call.1} parent=1 // pred_check_branch
      %29 = sbr.rel (0) target = $region33
    $region32: #{tpu_custom_call.1} parent=1 // pred_region
      _
    $region33: #{tpu_custom_call.1} parent=1 // pred_fallthru
      _
    %v31 = vld [vmem:[%s1] sm:$0x1]
    %s32 = scalar_lea.vmem %s1, 1
    %v33 = vld [vmem:[%s32] sm:$0x1]
    %v34 = vld [vmem:[%s0] sm:$0xff]
    %s35 = scalar_lea.vmem %s0, 8
    %v36 = vld [vmem:[%s35] sm:$0xff]
    %vm37 = vcmask 1047680
    %38 = vrot.lane.b32.xlu0 %v36, 16
    %v39 = vpop.permute.xlu0 %38
    %v40 = vsel %vm37, %v39, %v36
    %41 = vrot.lane.b32.xlu0 %v40, 16
    %v42 = vpop.permute.xlu0 %41
    %v43 = vsel %vm37, %v42, %v36
    %44 = vrot.lane.b32.xlu0 %v34, 16
    %v45 = vpop.permute.xlu0 %44
    %v46 = vsel %vm37, %v45, %v34
    %47 = vrot.lane.b32.xlu0 %v46, 16
    %v48 = vpop.permute.xlu0 %47
    %v49 = vsel %vm37, %v48, %v34
    %51 = vrot.lane.b32.xlu0 %v43, 113
    %v52 = vpop.permute.xlu0 %51
    %55 = vrot.lane.b32.xlu0 %v49, 113
    %v56 = vpop.permute.xlu0 %55
    %v58 = vpack.c.bf16 %v52, %v34
    %v59 = vpack.c.bf16 %v56, %v56
    %v60 = vld [vmem:[%s2] sm:$0xf]
    %vm61 = vcmask 195584
    %v63 = vsel %vm61, %v60, 0
    %vm65 = vcmask 1043456
    %v67 = vsel %vm65, %v59, 0
    %69 = vmatprep.subr.bf16.mxu0 0
    %70 = vmatpush1.bf16.msra.mxu0 0
    %71 = vmatprep.subr.bf16.mxu0 0
    %72 = vmatpush1.bf16.msra.mxu0 0
    %73 = vmatprep.subr.bf16.mxu0 0
    %74 = vmatpush1.bf16.msra.mxu0 0
    %75 = vmatprep.subr.bf16.mxu0 0
    %76 = vmatpush1.bf16.msra.mxu0 0
    %77 = vmatprep.subr.bf16.mxu0 0
    %78 = vmatpush1.bf16.msra.mxu0 0
    %79 = vmatprep.subr.bf16.mxu0 0
    %80 = vmatpush1.bf16.msra.mxu0 0
    %81 = vmatprep.subr.bf16.mxu0 0
    %82 = vmatpush1.bf16.msra.mxu0 %v67
    %83 = vmatprep.subr.bf16.mxu0 0
    %84 = vmatpush1.bf16.msra.mxu0 %v58
    %85 = vmatprep.subr.bf16.mxu0 0
    %86 = vmatpush2.bf16.msra.mxu0 0
    %87 = vmatprep.subr.bf16.mxu0 0
    %88 = vmatpush2.bf16.msra.mxu0 0
    %89 = vmatprep.subr.bf16.mxu0 0
    %90 = vmatpush2.bf16.msra.mxu0 0
    %91 = vmatprep.subr.bf16.mxu0 0
    %92 = vmatpush2.bf16.msra.mxu0 0
    %93 = vmatprep.subr.bf16.mxu0 0
    %94 = vmatpush2.bf16.msra.mxu0 0
    %95 = vmatprep.subr.bf16.mxu0 0
    %96 = vmatpush2.bf16.msra.mxu0 0
    %97 = vmatprep.subr.bf16.mxu0 0
    %98 = vmatpush2.bf16.msra.mxu0 0
    %99 = vmatprep.subr.bf16.mxu0 0
    %100 = vmatpush2.bf16.msra.mxu0 0
    %101 = vmatprep.mubr.bf16.mxu0 0
    %102 = vmatmul.mubr.bf16.gmra.mxu0 %v63
    %v103 = vpop.f32.mrf.mxu0
    %v104 = vadd.f32 0.0, %v103
    %v105 = vpop.f32.mrf.mxu0
    %v106 = vpop.f32.mrf.mxu0
    %v107 = vpop.f32.mrf.mxu0
    %108 = vdwg.mxu0
    %v109 = vpack.c.bf16 %v34, %v36
    %v110 = vpack.c.bf16 %v52, %v52
    %v112 = vsel %vm65, %v110, 0
    %114 = vmatprep.subr.bf16.mxu0 0
    %115 = vmatpush1.bf16.msra.mxu0 0
    %116 = vmatprep.subr.bf16.mxu0 0
    %117 = vmatpush1.bf16.msra.mxu0 0
    %118 = vmatprep.subr.bf16.mxu0 0
    %119 = vmatpush1.bf16.msra.mxu0 0
    %120 = vmatprep.subr.bf16.mxu0 0
    %121 = vmatpush1.bf16.msra.mxu0 0
    %122 = vmatprep.subr.bf16.mxu0 0
    %123 = vmatpush1.bf16.msra.mxu0 0
    %124 = vmatprep.subr.bf16.mxu0 0
    %125 = vmatpush1.bf16.msra.mxu0 0
    %126 = vmatprep.subr.bf16.mxu0 0
    %127 = vmatpush1.bf16.msra.mxu0 %v112
    %128 = vmatprep.subr.bf16.mxu0 0
    %129 = vmatpush1.bf16.msra.mxu0 %v109
    %130 = vmatprep.subr.bf16.mxu0 0
    %131 = vmatpush2.bf16.msra.mxu0 0
    %132 = vmatprep.subr.bf16.mxu0 0
    %133 = vmatpush2.bf16.msra.mxu0 0
    %134 = vmatprep.subr.bf16.mxu0 0
    %135 = vmatpush2.bf16.msra.mxu0 0
    %136 = vmatprep.subr.bf16.mxu0 0
    %137 = vmatpush2.bf16.msra.mxu0 0
    %138 = vmatprep.subr.bf16.mxu0 0
    %139 = vmatpush2.bf16.msra.mxu0 0
    %140 = vmatprep.subr.bf16.mxu0 0
    %141 = vmatpush2.bf16.msra.mxu0 0
    %142 = vmatprep.subr.bf16.mxu0 0
    %143 = vmatpush2.bf16.msra.mxu0 0
    %144 = vmatprep.subr.bf16.mxu0 0
    %145 = vmatpush2.bf16.msra.mxu0 0
    %146 = vmatprep.mubr.bf16.mxu0 0
    %147 = vmatmul.mubr.bf16.gmra.mxu0 %v63
    %v148 = vpop.f32.mrf.mxu0
    %v149 = vadd.f32 0.0, %v148
    %v150 = vpop.f32.mrf.mxu0
    %v151 = vpop.f32.mrf.mxu0
    %v152 = vpop.f32.mrf.mxu0
    %153 = vdwg.mxu0
    %v155 = vlaneseq
    %v156 = vshrl.u32 %v155, 7
    %v157 = vsub.s32 0, %v156
    %v158 = vrot.slane %v31, %v157
    %v160 = vmul.f32 %v104, %v158
    %v162 = vlaneseq
    %v163 = vshrl.u32 %v162, 7
    %v164 = vsub.s32 0, %v163
    %v165 = vrot.slane %v33, %v164
    %v167 = vmul.f32 %v149, %v165
    %vm168 = vcmask 130048
    %v169 = vsel %vm168, %v160, 0.0
    %170 = vadd.xlane.f32.xlu0 %v169
    %v171 = vpop.xlane.xlu0 %170
    %v172 = vsel %vm168, %v167, 0.0
    %173 = vadd.xlane.f32.xlu0 %v172
    %v174 = vpop.xlane.xlu0 %173
    %v175 = vadd.f32 %v171, %v174
    %v176 = vmul.f32 %v160, %v104
    %v177 = vsel %vm168, %v176, 0.0
    %178 = vadd.xlane.f32.xlu0 %v177
    %v179 = vpop.xlane.xlu0 %178
    %v180 = vmul.f32 %v167, %v149
    %v181 = vsel %vm168, %v180, 0.0
    %182 = vadd.xlane.f32.xlu0 %v181
    %v183 = vpop.xlane.xlu0 %182
    %v184 = vadd.f32 %v179, %v183
    %v185 = vmul.f32 %v175, 0.035714287
    %v186 = vmul.f32 %v184, 0.035714287
    %v187 = vmul.f32 %v185, %v185
    %v188 = vsub.f32 %v186, %v187
    %v189 = vld [vmem:[%s4] sm:$0xff]
    %v190 = vadd.f32 %v188, 1e-05
    %v191 = vrsqrt.pop %v190
    %v192 = vmul.f32 %v189, %v191
    %v193 = vld [vmem:[%s5] sm:$0xff]
    %v194 = vmul.f32 %v185, %v192
    %v195 = vsub.f32 %v193, %v194
    %197 = vset.pattern.permute.xlu0 0
    %198 = vperm.xlu0 %197, %v192
    %v199 = vpop.permute.xlu0 %198
    %v201 = vmul.f32 %v104, %v199
    %203 = vset.pattern.permute.xlu0 0
    %204 = vperm.xlu0 %203, %v195
    %v205 = vpop.permute.xlu0 %204
    %v207 = vadd.f32 %v201, %v205
    %v208 = vtanh.pop %v207
    %v209 = vmul.f32 %v208, %v158
    %v210 = vmul.f32 %v149, %v199
    %v211 = vadd.f32 %v210, %v205
    %v212 = vtanh.pop %v211
    %v213 = vmul.f32 %v212, %v165
    %214 = vrot.lane.b32.xlu0 %v213, 16
    %v215 = vpop.permute.xlu0 %214
    %v216 = vsel %vm37, %v215, %v213
    %217 = vrot.lane.b32.xlu0 %v216, 16
    %v218 = vpop.permute.xlu0 %217
    %v219 = vsel %vm37, %v218, %v213
    %220 = vrot.lane.b32.xlu0 %v209, 16
    %v221 = vpop.permute.xlu0 %220
    %v222 = vsel %vm37, %v221, %v209
    %223 = vrot.lane.b32.xlu0 %v222, 16
    %v224 = vpop.permute.xlu0 %223
    %v225 = vsel %vm37, %v224, %v209
    %227 = vrot.lane.b32.xlu0 %v219, 113
    %v228 = vpop.permute.xlu0 %227
    %231 = vrot.lane.b32.xlu0 %v225, 113
    %v232 = vpop.permute.xlu0 %231
    %v234 = vpack.c.bf16 %v228, %v209
    %v235 = vpack.c.bf16 %v232, %v232
    %v236 = vld [vmem:[%s3] sm:$0xf]
    %v238 = vsel %vm61, %v236, 0
    %v241 = vsel %vm65, %v235, 0
    %243 = vmatprep.subr.bf16.mxu0 0
    %244 = vmatpush1.bf16.msra.mxu0 0
    %245 = vmatprep.subr.bf16.mxu0 0
    %246 = vmatpush1.bf16.msra.mxu0 0
    %247 = vmatprep.subr.bf16.mxu0 0
    %248 = vmatpush1.bf16.msra.mxu0 0
    %249 = vmatprep.subr.bf16.mxu0 0
    %250 = vmatpush1.bf16.msra.mxu0 0
    %251 = vmatprep.subr.bf16.mxu0 0
    %252 = vmatpush1.bf16.msra.mxu0 0
    %253 = vmatprep.subr.bf16.mxu0 0
    %254 = vmatpush1.bf16.msra.mxu0 0
    %255 = vmatprep.subr.bf16.mxu0 0
    %256 = vmatpush1.bf16.msra.mxu0 %v241
    %257 = vmatprep.subr.bf16.mxu0 0
    %258 = vmatpush1.bf16.msra.mxu0 %v234
    %259 = vmatprep.subr.bf16.mxu0 0
    %260 = vmatpush2.bf16.msra.mxu0 0
    %261 = vmatprep.subr.bf16.mxu0 0
    %262 = vmatpush2.bf16.msra.mxu0 0
    %263 = vmatprep.subr.bf16.mxu0 0
    %264 = vmatpush2.bf16.msra.mxu0 0
    %265 = vmatprep.subr.bf16.mxu0 0
    %266 = vmatpush2.bf16.msra.mxu0 0
    %267 = vmatprep.subr.bf16.mxu0 0
    %268 = vmatpush2.bf16.msra.mxu0 0
    %269 = vmatprep.subr.bf16.mxu0 0
    %270 = vmatpush2.bf16.msra.mxu0 0
    %271 = vmatprep.subr.bf16.mxu0 0
    %272 = vmatpush2.bf16.msra.mxu0 0
    %273 = vmatprep.subr.bf16.mxu0 0
    %274 = vmatpush2.bf16.msra.mxu0 0
    %275 = vmatprep.mubr.bf16.mxu0 0
    %276 = vmatmul.mubr.bf16.gmra.mxu0 %v238
    %v277 = vpop.f32.mrf.mxu0
    %v278 = vadd.f32 0.0, %v277
    %v279 = vpop.f32.mrf.mxu0
    %v280 = vpop.f32.mrf.mxu0
    %v281 = vpop.f32.mrf.mxu0
    %282 = vdwg.mxu0
    %v283 = vpack.c.bf16 %v209, %v213
    %v284 = vpack.c.bf16 %v228, %v228
    %v286 = vsel %vm65, %v284, 0
    %288 = vmatprep.subr.bf16.mxu0 0
    %289 = vmatpush1.bf16.msra.mxu0 0
    %290 = vmatprep.subr.bf16.mxu0 0
    %291 = vmatpush1.bf16.msra.mxu0 0
    %292 = vmatprep.subr.bf16.mxu0 0
    %293 = vmatpush1.bf16.msra.mxu0 0
    %294 = vmatprep.subr.bf16.mxu0 0
    %295 = vmatpush1.bf16.msra.mxu0 0
    %296 = vmatprep.subr.bf16.mxu0 0
    %297 = vmatpush1.bf16.msra.mxu0 0
    %298 = vmatprep.subr.bf16.mxu0 0
    %299 = vmatpush1.bf16.msra.mxu0 0
    %300 = vmatprep.subr.bf16.mxu0 0
    %301 = vmatpush1.bf16.msra.mxu0 %v286
    %302 = vmatprep.subr.bf16.mxu0 0
    %303 = vmatpush1.bf16.msra.mxu0 %v283
    %304 = vmatprep.subr.bf16.mxu0 0
    %305 = vmatpush2.bf16.msra.mxu0 0
    %306 = vmatprep.subr.bf16.mxu0 0
    %307 = vmatpush2.bf16.msra.mxu0 0
    %308 = vmatprep.subr.bf16.mxu0 0
    %309 = vmatpush2.bf16.msra.mxu0 0
    %310 = vmatprep.subr.bf16.mxu0 0
    %311 = vmatpush2.bf16.msra.mxu0 0
    %312 = vmatprep.subr.bf16.mxu0 0
    %313 = vmatpush2.bf16.msra.mxu0 0
    %314 = vmatprep.subr.bf16.mxu0 0
    %315 = vmatpush2.bf16.msra.mxu0 0
    %316 = vmatprep.subr.bf16.mxu0 0
    %317 = vmatpush2.bf16.msra.mxu0 0
    %318 = vmatprep.subr.bf16.mxu0 0
    %319 = vmatpush2.bf16.msra.mxu0 0
    %320 = vmatprep.mubr.bf16.mxu0 0
    %321 = vmatmul.mubr.bf16.gmra.mxu0 %v238
    %v322 = vpop.f32.mrf.mxu0
    %v323 = vadd.f32 0.0, %v322
    %v324 = vpop.f32.mrf.mxu0
    %v325 = vpop.f32.mrf.mxu0
    %v326 = vpop.f32.mrf.mxu0
    %327 = vdwg.mxu0
    %v328 = vmul.f32 %v278, %v158
    %v329 = vmul.f32 %v323, %v165
    %v330 = vsel %vm168, %v328, 0.0
    %331 = vadd.xlane.f32.xlu0 %v330
    %v332 = vpop.xlane.xlu0 %331
    %v333 = vsel %vm168, %v329, 0.0
    %334 = vadd.xlane.f32.xlu0 %v333
    %v335 = vpop.xlane.xlu0 %334
    %v336 = vadd.f32 %v332, %v335
    %v337 = vmul.f32 %v328, %v278
    %v338 = vsel %vm168, %v337, 0.0
    %339 = vadd.xlane.f32.xlu0 %v338
    %v340 = vpop.xlane.xlu0 %339
    %v341 = vmul.f32 %v329, %v323
    %v342 = vsel %vm168, %v341, 0.0
    %343 = vadd.xlane.f32.xlu0 %v342
    %v344 = vpop.xlane.xlu0 %343
    %v345 = vadd.f32 %v340, %v344
    %v346 = vmul.f32 %v336, 0.035714287
    %v347 = vmul.f32 %v345, 0.035714287
    %v348 = vmul.f32 %v346, %v346
    %v349 = vsub.f32 %v347, %v348
    %v350 = vld [vmem:[%s6] sm:$0xff]
    %v351 = vadd.f32 %v349, 1e-05
    %v352 = vrsqrt.pop %v351
    %v353 = vmul.f32 %v350, %v352
    %v354 = vld [vmem:[%s7] sm:$0xff]
    %v355 = vmul.f32 %v346, %v353
    %v356 = vsub.f32 %v354, %v355
    %358 = vset.pattern.permute.xlu0 0
    %359 = vperm.xlu0 %358, %v353
    %v360 = vpop.permute.xlu0 %359
    %v362 = vmul.f32 %v278, %v360
    %364 = vset.pattern.permute.xlu0 0
    %365 = vperm.xlu0 %364, %v356
    %v366 = vpop.permute.xlu0 %365
    %v368 = vadd.f32 %v362, %v366
    %v369 = vtanh.pop %v368
    %v370 = vmul.f32 %v369, %v158
    %v371 = vmul.f32 %v323, %v360
    %v372 = vadd.f32 %v371, %v366
    %v373 = vtanh.pop %v372
    %v374 = vmul.f32 %v373, %v165
    %v375 = vmax.f32 %v370, %v374
    %vm376 = vcmask 64512
    %377 = vst.msk [vmem:[#allocation2] sm:$0xff] %vm376, %v375
    %379 = vrot.lane.b32.xlu0 %v375, 120
    %v380 = vpop.permute.xlu0 %379
    %s382 = scalar_lea.vmem [#allocation2], 8
    %383 = vst.msk [vmem:[%s382] sm:$0xff] %vm376, %v380
    // Predicated region
    $region34: #{tpu_custom_call.1} parent=1 // pred_check
      _
    $region35: #{tpu_custom_call.1} parent=1 // pred_check_branch
      %385 = sbr.rel (0) target = $region37
    $region36: #{tpu_custom_call.1} parent=1 // pred_region
      %s387 = ssub.s32 256, 256
      %388 = vsyncadd [#allocation3], %s387
      %s389 = sshll.u32 [#allocation2], 4
      %s390 = int_to_ptr.vmem [resolvable:$true] %s389
      %395 = dma.vmem_to_hbm [thread:$0]  %s390, 256, %s8, [#allocation3], 128, 128, 8
    $region37: #{tpu_custom_call.1} parent=1 // pred_fallthru
      _
    // Predicated region
    $region38: #{tpu_custom_call.1} parent=1 // pred_check
      _
    $region39: #{tpu_custom_call.1} parent=1 // pred_check_branch
      %397 = sbr.rel (0) target = $region41
    $region40: #{tpu_custom_call.1} parent=1 // pred_region
      %398 = dma.done [#allocation3], 256
    $region41: #{tpu_custom_call.1} parent=1 // pred_fallthru
      _
    %399 = vsyncpa [#allocation3], 1

</llo_original>
